<compile_context>
chip_gen: v5e
topology: v5e:2x2
jax: 0.10.0
libtpu: 0.0.40
codegen_flags: <defaults>
</compile_context>

<pallas_src>
import jax
import jax.numpy as jnp
from jax.experimental import pallas as pl
from jax.experimental.pallas import tpu as pltpu


def _lora_moe_kernel(tile_expert_ref, x_ref, w_ref, a_ref, b_ref, o_ref):
    # x_ref : [TM, D_in]  bf16   token tile (all rows belong to one expert)
    # w_ref : [D_in, TN]  bf16   pre-transposed base weight slice of that expert
    # a_ref : [D_in, r]   bf16   pre-transposed lora_A of that expert
    # b_ref : [r,   TN]   bf16   pre-transposed, pre-scaled lora_B slice
    # o_ref : [TM,  TN]   f32
    del tile_expert_ref  # only used by the index_maps
    x = x_ref[...]
    base = jnp.dot(x, w_ref[...], preferred_element_type=jnp.float32)   # [TM, TN]
    h = jnp.dot(x, a_ref[...], preferred_element_type=jnp.float32)      # [TM, r]
    lora = jnp.dot(h.astype(jnp.bfloat16), b_ref[...],
                   preferred_element_type=jnp.float32)                  # [TM, TN]
    o_ref[...] = base + lora


def lora_moe_fused_linear(x, m_sizes, w_base, lora_a, lora_b, *, scaling,
                          tm=128, tn=None):
    """Grouped LoRA MoE linear: base grouped-GEMM + low-rank LoRA delta."""
    T, D_in = x.shape
    E, D_out, _ = w_base.shape
    r = lora_a.shape[1]

    if tn is None:
        tn = 128 if D_out % 128 == 0 else D_out
    assert D_out % tn == 0
    num_n_tiles = D_out // tn

    # ---- group metadata (plain JAX glue, works under jit with traced m_sizes) ----
    m_sizes = m_sizes.astype(jnp.int32)
    num_m_tiles = pl.cdiv(T, tm) + E          # static worst case: each group adds <= 1 tile
    t_pad = num_m_tiles * tm

    padded_sizes = ((m_sizes + tm - 1) // tm) * tm                        # [E]
    padded_starts = jnp.concatenate(
        [jnp.zeros((1,), jnp.int32), jnp.cumsum(padded_sizes)[:-1].astype(jnp.int32)])
    group_starts = jnp.concatenate(
        [jnp.zeros((1,), jnp.int32), jnp.cumsum(m_sizes)[:-1].astype(jnp.int32)])

    expert_of_token = jnp.repeat(jnp.arange(E, dtype=jnp.int32), m_sizes,
                                 total_repeat_length=T)                   # [T]
    local_pos = jnp.arange(T, dtype=jnp.int32) - group_starts[expert_of_token]
    dest = padded_starts[expert_of_token] + local_pos                     # [T]

    # Expert id owning each padded token tile (trailing dummy tiles clamped; they
    # contain only zero rows so their output is zero and gets dropped).
    padded_tile_ends = (padded_starts + padded_sizes) // tm               # [E]
    tile_expert = jnp.searchsorted(
        padded_tile_ends, jnp.arange(num_m_tiles, dtype=jnp.int32), side="right")
    tile_expert = jnp.minimum(tile_expert, E - 1).astype(jnp.int32)

    # ---- one-time data prep: bf16 cast, scatter to padded layout, pre-transpose ----
    x_pad = jnp.zeros((t_pad, D_in), jnp.bfloat16).at[dest].set(x.astype(jnp.bfloat16))
    w_t = jnp.swapaxes(w_base, 1, 2).astype(jnp.bfloat16)                 # [E, D_in, D_out]
    a_t = jnp.swapaxes(lora_a, 1, 2).astype(jnp.bfloat16)                 # [E, D_in, r]
    b_t = jnp.swapaxes(lora_b * scaling, 1, 2).astype(jnp.bfloat16)       # [E, r, D_out]

    cost = pl.CostEstimate(
        flops=2 * t_pad * D_in * D_out + 2 * t_pad * D_in * r + 2 * t_pad * r * D_out,
        transcendentals=0,
        bytes_accessed=(x_pad.size * 2 + w_t.size * 2 + a_t.size * 2 + b_t.size * 2
                        + t_pad * D_out * 4),
    )

    out_pad = pl.pallas_call(
        _lora_moe_kernel,
        out_shape=jax.ShapeDtypeStruct((t_pad, D_out), jnp.float32),
        grid_spec=pltpu.PrefetchScalarGridSpec(
            num_scalar_prefetch=1,
            grid=(num_m_tiles, num_n_tiles),
            in_specs=[
                # token tile i (same tile reused across all n tiles -> no re-DMA)
                pl.BlockSpec((tm, D_in), lambda i, j, te: (i, 0)),
                # expert weights selected by the prefetched tile -> expert table
                pl.BlockSpec((pl.Squeezed(), D_in, tn), lambda i, j, te: (te[i], 0, j)),
                pl.BlockSpec((pl.Squeezed(), D_in, r), lambda i, j, te: (te[i], 0, 0)),
                pl.BlockSpec((pl.Squeezed(), r, tn), lambda i, j, te: (te[i], 0, j)),
            ],
            out_specs=pl.BlockSpec((tm, tn), lambda i, j, te: (i, j)),
        ),
        compiler_params=pltpu.CompilerParams(
            dimension_semantics=("parallel", "parallel"),
            vmem_limit_bytes=32 * 1024 * 1024,
        ),
        cost_estimate=cost,
    )(tile_expert, x_pad, w_t, a_t, b_t)

    # Gather back to the original (grouped-by-expert) token order.
    return out_pad[dest]


def _reference(x, m_sizes, w_base, lora_a, lora_b, scaling):
    """f32 reference mirroring the kernel's bf16 input rounding."""
    T = x.shape[0]
    E, D_out, _ = w_base.shape
    expert_ids = jnp.repeat(jnp.arange(E), m_sizes, total_repeat_length=T)
    f32 = jnp.float32
    hi = jax.lax.Precision.HIGHEST
    xb = x.astype(jnp.bfloat16).astype(f32)
    wb = w_base.astype(jnp.bfloat16).astype(f32)
    ab = lora_a.astype(jnp.bfloat16).astype(f32)
    bb = (lora_b * scaling).astype(jnp.bfloat16).astype(f32)
    out = jnp.zeros((T, D_out), f32)
    for e in range(E):
        mask = (expert_ids == e)[:, None]
        xe = jnp.where(mask, xb, 0.0)
        base = jnp.dot(xe, wb[e].T, precision=hi)
        h = jnp.dot(xe, ab[e].T, precision=hi).astype(jnp.bfloat16).astype(f32)
        lora = jnp.dot(h, bb[e].T, precision=hi)
        out = out + base + lora
    return out


if __name__ == "__main__":
    # Small shapes consistent with a MoeFusedLinear LoRA layer.
    E = 4            # num_experts
    T = 96           # total tokens (grouped by expert)
    D_in = 256       # in_features
    D_out = 256      # out_features (multiple of 128 -> lane-dense output tiles)
    r = 8            # LoRA rank
    lora_alpha = 16
    scaling = lora_alpha / r

    key = jax.random.PRNGKey(0)
    k_x, k_w, k_a, k_b = jax.random.split(key, 4)

    x = jax.random.normal(k_x, (T, D_in), jnp.float32)
    m_sizes = jnp.array([16, 40, 8, 32], jnp.int32)   # sums to T

    bound = 1.0 / jnp.sqrt(D_in)
    w_base = jax.random.uniform(k_w, (E, D_out, D_in), jnp.float32, -bound, bound)
    lora_a = jax.random.uniform(k_a, (E, r, D_in), jnp.float32, -bound, bound)
    # NOTE: the PyTorch module initializes lora_B to zeros (LoRA delta starts at 0).
    # Small nonzero values are used here so the LoRA path is actually exercised.
    lora_b = 0.02 * jax.random.normal(k_b, (E, D_out, r), jnp.float32)

    out = lora_moe_fused_linear(x, m_sizes, w_base, lora_a, lora_b,
                                scaling=scaling, tm=128, tn=128)
    out = jax.block_until_ready(out)

    ref = _reference(x, m_sizes, w_base, lora_a, lora_b, scaling)
    assert out.shape == (T, D_out)
    max_err = float(jnp.max(jnp.abs(out - ref)))
    assert jnp.allclose(out, ref, atol=2e-3, rtol=2e-3), f"mismatch vs reference (max abs err {max_err})"

    print("KERNEL_OK")
</pallas_src>

<mosaic_0001>
module attributes {stable_mosaic.version = 11 : i64} {
  func.func @_lora_moe_kernel(%arg0: i32, %arg1: i32, %arg2: memref<5xi32, #tpu.memory_space<smem>>, %arg3: memref<128x256xbf16, #tpu.memory_space<vmem>>, %arg4: memref<1x256x128xbf16, #tpu.memory_space<vmem>>, %arg5: memref<1x256x8xbf16, #tpu.memory_space<vmem>>, %arg6: memref<1x8x128xbf16, #tpu.memory_space<vmem>>, %arg7: memref<128x128xf32, #tpu.memory_space<vmem>>) attributes {dimension_semantics = [#tpu.dimension_semantics<parallel>, #tpu.dimension_semantics<parallel>], iteration_bounds = array<i64: 5, 2>, scalar_prefetch = 1 : i64, scratch_operands = 0 : i64, tpu.core_type = #tpu.core_type<tc>, window_params = [{transform_indices = @transform_0, window_bounds = array<i64: 128, 256>}, {transform_indices = @transform_1, window_bounds = array<i64: 1, 256, 128>}, {transform_indices = @transform_2, window_bounds = array<i64: 1, 256, 8>}, {transform_indices = @transform_3, window_bounds = array<i64: 1, 8, 128>}, {transform_indices = @transform_4, window_bounds = array<i64: 128, 128>}]} {
    %c0 = arith.constant 0 : index
    %c0_0 = arith.constant 0 : index
    %0 = vector.load %arg3[%c0, %c0_0] : memref<128x256xbf16, #tpu.memory_space<vmem>>, vector<128x256xbf16>
    %c0_1 = arith.constant 0 : index
    %c0_2 = arith.constant 0 : index
    %c0_3 = arith.constant 0 : index
    %1 = vector.load %arg4[%c0_1, %c0_2, %c0_3] : memref<1x256x128xbf16, #tpu.memory_space<vmem>>, vector<1x256x128xbf16>
    %2 = vector.shape_cast %1 : vector<1x256x128xbf16> to vector<256x128xbf16>
    %cst = arith.constant dense<0.000000e+00> : vector<128x128xf32>
    %3 = tpu.matmul %0, %2, %cst {dimension_numbers = #tpu.dot_dimension_numbers<[1], [0], [0], [1], [0, 0, 1, 1], [], []>} : vector<128x256xbf16>, vector<256x128xbf16>, vector<128x128xf32> -> vector<128x128xf32>
    %c0_4 = arith.constant 0 : index
    %c0_5 = arith.constant 0 : index
    %c0_6 = arith.constant 0 : index
    %4 = vector.load %arg5[%c0_4, %c0_5, %c0_6] : memref<1x256x8xbf16, #tpu.memory_space<vmem>>, vector<1x256x8xbf16>
    %5 = vector.shape_cast %4 : vector<1x256x8xbf16> to vector<256x8xbf16>
    %cst_7 = arith.constant dense<0.000000e+00> : vector<128x8xf32>
    %6 = tpu.matmul %0, %5, %cst_7 {dimension_numbers = #tpu.dot_dimension_numbers<[1], [0], [0], [1], [0, 0, 1, 1], [], []>} : vector<128x256xbf16>, vector<256x8xbf16>, vector<128x8xf32> -> vector<128x8xf32>
    %7 = arith.truncf %6 : vector<128x8xf32> to vector<128x8xbf16>
    %c0_8 = arith.constant 0 : index
    %c0_9 = arith.constant 0 : index
    %c0_10 = arith.constant 0 : index
    %8 = vector.load %arg6[%c0_8, %c0_9, %c0_10] : memref<1x8x128xbf16, #tpu.memory_space<vmem>>, vector<1x8x128xbf16>
    %9 = vector.shape_cast %8 : vector<1x8x128xbf16> to vector<8x128xbf16>
    %cst_11 = arith.constant dense<0.000000e+00> : vector<128x128xf32>
    %10 = tpu.matmul %7, %9, %cst_11 {dimension_numbers = #tpu.dot_dimension_numbers<[1], [0], [0], [1], [0, 0, 1, 1], [], []>} : vector<128x8xbf16>, vector<8x128xbf16>, vector<128x128xf32> -> vector<128x128xf32>
    %11 = arith.addf %3, %10 : vector<128x128xf32>
    %c0_12 = arith.constant 0 : index
    %c0_13 = arith.constant 0 : index
    %12 = vector.load %arg7[%c0_12, %c0_13] : memref<128x128xf32, #tpu.memory_space<vmem>>, vector<128x128xf32>
    tpu.vector_store %arg7[%c0_12, %c0_13], %11 {strides = array<i32>} : memref<128x128xf32, #tpu.memory_space<vmem>>, vector<128x128xf32>,
    return
  }
  func.func @transform_0(%arg0: i32, %arg1: i32, %arg2: memref<5xi32, #tpu.memory_space<smem>>) -> (i32, i32) {
    %c0_i32 = arith.constant 0 : i32
    %c0_i32_0 = arith.constant 0 : i32
    return %arg0, %c0_i32 : i32, i32
  }
  func.func @transform_1(%arg0: i32, %arg1: i32, %arg2: memref<5xi32, #tpu.memory_space<smem>>) -> (i32, i32, i32) {
    %0 = arith.index_cast %arg0 : i32 to index
    %1 = memref.load %arg2[%0] : memref<5xi32, #tpu.memory_space<smem>>
    %c0_i32 = arith.constant 0 : i32
    %c0_i32_0 = arith.constant 0 : i32
    return %1, %c0_i32, %arg1 : i32, i32, i32
  }
  func.func @transform_2(%arg0: i32, %arg1: i32, %arg2: memref<5xi32, #tpu.memory_space<smem>>) -> (i32, i32, i32) {
    %0 = arith.index_cast %arg0 : i32 to index
    %1 = memref.load %arg2[%0] : memref<5xi32, #tpu.memory_space<smem>>
    %c0_i32 = arith.constant 0 : i32
    %c0_i32_0 = arith.constant 0 : i32
    %c0_i32_1 = arith.constant 0 : i32
    return %1, %c0_i32, %c0_i32_0 : i32, i32, i32
  }
  func.func @transform_3(%arg0: i32, %arg1: i32, %arg2: memref<5xi32, #tpu.memory_space<smem>>) -> (i32, i32, i32) {
    %0 = arith.index_cast %arg0 : i32 to index
    %1 = memref.load %arg2[%0] : memref<5xi32, #tpu.memory_space<smem>>
    %c0_i32 = arith.constant 0 : i32
    %c0_i32_0 = arith.constant 0 : i32
    return %1, %c0_i32, %arg1 : i32, i32, i32
  }
  func.func @transform_4(%arg0: i32, %arg1: i32, %arg2: memref<5xi32, #tpu.memory_space<smem>>) -> (i32, i32) {
    %c0_i32 = arith.constant 0 : i32
    return %arg0, %arg1 : i32, i32
  }
}

</mosaic_0001>

<llo_original>
// kernel: tpu_custom_call.1
$region0: #{tpu_custom_call.1}
  #allocation0 [shape = 'u32[]', space=smem, size = 0x4, offset = 0x4, fixed_abs, tag = 'smem constant byte address 0x4 - core index']
  #allocation1 [shape = 'u32[72,128]{1,0:T(1,128)}', space=vmem, size = 0x9000, scoped, tag = 'internal scratch']
  #allocation2 [shape = 's32[1]{0}', space=sflag, size = 0x4, scoped, tag = 'scoped memory for tpu_custom_call.1']
  #allocation3 [shape = 'u8[512]{0}', space=smem, size = 0x200, scoped, tag = 'prefetched SMEM operand 0']
  %s0 = inlined_call_operand.vmem [shape: s32[5], index: 0, kind: input, shape index: {}]
  %s1 = inlined_call_operand.hbm [shape: bf16[640,256], index: 1, kind: input, shape index: {}]
  %s2 = inlined_call_operand.hbm [shape: bf16[4,256,256], index: 2, kind: input, shape index: {}]
  %s3 = inlined_call_operand.vmem [shape: bf16[4,256,8], index: 3, kind: input, shape index: {}]
  %s4 = inlined_call_operand.vmem [shape: bf16[4,8,256], index: 4, kind: input, shape index: {}]
  %s5 = inlined_call_operand.hbm [shape: f32[640,256], index: 5, kind: output, shape index: {}]
  %s6 = sld [smem:[#allocation0]]
  $region57: #{tpu_custom_call.1} parent=0
    _
  %s8 = ssub.s32 1, %s6
  %s9 = scalar_select 0, %s8, %s6
  %s11 = sshll.u32 %s0, 4
  %s12 = int_to_ptr.vmem [resolvable:$true] %s11
  %14 = dma.vmem_to_smem %s12, 16, [#allocation3], [#allocation2]
  %16 = dma.done [#allocation2], 16
  %17 = sfence
  $region1: #{tpu_custom_call.1} parent=0
    #allocation4 [shape = 'u8[131072]{0}', space=vmem, size = 0x20000, scoped, tag = 'input window, operand 1']
    #allocation5 [shape = 's32[2]{0}', space=sflag, size = 0x8, scoped, tag = 'scoped memory for tpu_custom_call.1']
    #allocation6 [shape = 's32[2]{0}', space=sflag, size = 0x8, scoped, tag = 'scoped memory for tpu_custom_call.1']
    #allocation7 [shape = 'u8[131072]{0}', space=vmem, size = 0x20000, scoped, tag = 'input window, operand 2']
    #allocation8 [shape = 's32[2]{0}', space=sflag, size = 0x8, scoped, tag = 'scoped memory for tpu_custom_call.1']
    #allocation9 [shape = 'u8[131072]{0}', space=vmem, size = 0x20000, scoped, tag = 'output window, operand 0']
    %18 = vsyncpa [#allocation5], 0
    %s19 = scalar_lea.sflag [#allocation5], 1
    %20 = vsyncpa %s19, 0
    %21 = vsyncpa [#allocation8], 0
    %s22 = scalar_lea.sflag [#allocation8], 1
    %23 = vsyncpa %s22, 0
    %24 = vsyncpa [#allocation6], 0
    %s25 = scalar_lea.sflag [#allocation6], 1
    %26 = vsyncpa %s25, 0
    loop: start=0, step=1, limit=12
    $region2: #{tpu_custom_call.1} parent=1 // loop_pre_header
      _
    $region3: #{tpu_custom_call.1} parent=1 // loop_header
      %s28 = sphi 0, %s32
      %p29 = scmp.ge.s32.totalorder %s28, 12
      %s35 = sphi 0, %s47
      %s36 = sphi 0, %s43
      %s37 = sphi 0, %s35
      %s38 = sphi 0, %s36
      %s39 = sphi 0, %s37
      %s40 = sphi 0, %s38
      %s50 = sphi 0, %s52
      %s53 = sphi 0, %s50
      %s54 = sphi 0, %s53
      %s70 = sphi 0, %s54
      %s80 = sphi 0, %s82
      %s83 = sphi 0, %s80
      %s84 = sphi 0, %s83
      %s100 = sphi 0, %s84
      %s108 = sphi 0, %s110
      %s111 = sphi 0, %s108
      %s112 = sphi 0, %s111
      %s128 = sphi 0, %s112
      %s138 = sphi 0, %s140
      %s141 = sphi 0, %s138
      %s142 = sphi 0, %s141
      %s158 = sphi 0, %s142
      %s166 = sphi 0, %s168
      %s169 = sphi 0, %s166
      %s170 = sphi 0, %s169
      %s186 = sphi 0, %s170
    $region4: #{tpu_custom_call.1} parent=1 // loop_header_branch
      %31 = sbr.rel (%p29) target = $region8
    $region5: #{tpu_custom_call.1} parent=1 // loop_body
      %s33 = ssub.s32 %s28, 1
      %s34 = ssub.s32 %s28, 2
      %s41 = sadd.s32 1, %s36
      %p42 = scmp.ge.s32.totalorder %s41, 2
      %s43 = scalar_select %p42, 0, %s41
      %s44 = sadd.s32 1, %s35
      %s45 = scalar_select %p42, %s44, %s35
      %p46 = scmp.ge.s32.totalorder %s45, 5
      %s47 = scalar_select %p46, 0, %s45
      %s48 = ssub.s32 %s35, %s47
      %p49 = scmp.eq.s32.totalorder %s48, 0
      %s51 = sadd.s32 %s50, 1
      %s52 = scalar_select %p49, %s50, %s51
      %p55 = pneg %p49
      %p56 = scmp.eq.s32.totalorder %s28, 9
      %p57 = por %p55, %p56
      %p58 = scmp.ne.s32.totalorder %s50, %s53
      %p59 = scmp.eq.s32.totalorder %s28, 0
      %p60 = por %p58, %p59
      %p61 = scmp.ne.s32.totalorder %s50, %s53
      %p62 = scmp.eq.s32.totalorder %s33, 9
      %p63 = por %p61, %p62
      %p64 = scmp.ne.s32.totalorder %s53, %s54
      %p65 = scmp.eq.s32.totalorder %s33, 0
      %p66 = por %p64, %p65
      %p67 = scmp.ne.s32.totalorder %s53, %s54
      %p68 = scmp.eq.s32.totalorder %s34, 9
      %p69 = por %p67, %p68
      %p71 = scmp.ne.s32.totalorder %s54, %s70
      %p72 = scmp.eq.s32.totalorder %s34, 0
      %p73 = por %p71, %p72
      %s74 = sld [smem:[#allocation3 + %s35]]
      %s75 = sld [smem:[#allocation3 + %s47]]
      %s76 = ssub.s32 %s74, %s75
      %s77 = ssub.s32 %s36, %s43
      %s78 = sor.u32 %s76, %s77
      %p79 = scmp.eq.s32.totalorder %s78, 0
      %s81 = sadd.s32 %s80, 1
      %s82 = scalar_select %p79, %s80, %s81
      %p85 = pneg %p79
      %p86 = scmp.eq.s32.totalorder %s28, 9
      %p87 = por %p85, %p86
      %p88 = scmp.ne.s32.totalorder %s80, %s83
      %p89 = scmp.eq.s32.totalorder %s28, 0
      %p90 = por %p88, %p89
      %p91 = scmp.ne.s32.totalorder %s80, %s83
      %p92 = scmp.eq.s32.totalorder %s33, 9
      %p93 = por %p91, %p92
      %p94 = scmp.ne.s32.totalorder %s83, %s84
      %p95 = scmp.eq.s32.totalorder %s33, 0
      %p96 = por %p94, %p95
      %p97 = scmp.ne.s32.totalorder %s83, %s84
      %p98 = scmp.eq.s32.totalorder %s34, 9
      %p99 = por %p97, %p98
      %p101 = scmp.ne.s32.totalorder %s84, %s100
      %p102 = scmp.eq.s32.totalorder %s34, 0
      %p103 = por %p101, %p102
      %s104 = sld [smem:[#allocation3 + %s35]]
      %s105 = sld [smem:[#allocation3 + %s47]]
      %s106 = ssub.s32 %s104, %s105
      %p107 = scmp.eq.s32.totalorder %s106, 0
      %s109 = sadd.s32 %s108, 1
      %s110 = scalar_select %p107, %s108, %s109
      %p113 = pneg %p107
      %p114 = scmp.eq.s32.totalorder %s28, 9
      %p115 = por %p113, %p114
      %p116 = scmp.ne.s32.totalorder %s108, %s111
      %p117 = scmp.eq.s32.totalorder %s28, 0
      %p118 = por %p116, %p117
      %p119 = scmp.ne.s32.totalorder %s108, %s111
      %p120 = scmp.eq.s32.totalorder %s33, 9
      %p121 = por %p119, %p120
      %p122 = scmp.ne.s32.totalorder %s111, %s112
      %p123 = scmp.eq.s32.totalorder %s33, 0
      %p124 = por %p122, %p123
      %p125 = scmp.ne.s32.totalorder %s111, %s112
      %p126 = scmp.eq.s32.totalorder %s34, 9
      %p127 = por %p125, %p126
      %p129 = scmp.ne.s32.totalorder %s112, %s128
      %p130 = scmp.eq.s32.totalorder %s34, 0
      %p131 = por %p129, %p130
      %s132 = sld [smem:[#allocation3 + %s35]]
      %s133 = sld [smem:[#allocation3 + %s47]]
      %s134 = ssub.s32 %s132, %s133
      %s135 = ssub.s32 %s36, %s43
      %s136 = sor.u32 %s134, %s135
      %p137 = scmp.eq.s32.totalorder %s136, 0
      %s139 = sadd.s32 %s138, 1
      %s140 = scalar_select %p137, %s138, %s139
      %p143 = pneg %p137
      %p144 = scmp.eq.s32.totalorder %s28, 9
      %p145 = por %p143, %p144
      %p146 = scmp.ne.s32.totalorder %s138, %s141
      %p147 = scmp.eq.s32.totalorder %s28, 0
      %p148 = por %p146, %p147
      %p149 = scmp.ne.s32.totalorder %s138, %s141
      %p150 = scmp.eq.s32.totalorder %s33, 9
      %p151 = por %p149, %p150
      %p152 = scmp.ne.s32.totalorder %s141, %s142
      %p153 = scmp.eq.s32.totalorder %s33, 0
      %p154 = por %p152, %p153
      %p155 = scmp.ne.s32.totalorder %s141, %s142
      %p156 = scmp.eq.s32.totalorder %s34, 9
      %p157 = por %p155, %p156
      %p159 = scmp.ne.s32.totalorder %s142, %s158
      %p160 = scmp.eq.s32.totalorder %s34, 0
      %p161 = por %p159, %p160
      %s162 = ssub.s32 %s35, %s47
      %s163 = ssub.s32 %s36, %s43
      %s164 = sor.u32 %s162, %s163
      %p165 = scmp.eq.s32.totalorder %s164, 0
      %s167 = sadd.s32 %s166, 1
      %s168 = scalar_select %p165, %s166, %s167
      %p171 = pneg %p165
      %p172 = scmp.eq.s32.totalorder %s28, 9
      %p173 = por %p171, %p172
      %p174 = scmp.ne.s32.totalorder %s166, %s169
      %p175 = scmp.eq.s32.totalorder %s28, 0
      %p176 = por %p174, %p175
      %p177 = scmp.ne.s32.totalorder %s166, %s169
      %p178 = scmp.eq.s32.totalorder %s33, 9
      %p179 = por %p177, %p178
      %p180 = scmp.ne.s32.totalorder %s169, %s170
      %p181 = scmp.eq.s32.totalorder %s33, 0
      %p182 = por %p180, %p181
      %p183 = scmp.ne.s32.totalorder %s169, %s170
      %p184 = scmp.eq.s32.totalorder %s34, 9
      %p185 = por %p183, %p184
      %p187 = scmp.ne.s32.totalorder %s170, %s186
      %p188 = scmp.eq.s32.totalorder %s34, 0
      %p189 = por %p187, %p188
      %p190 = scmp.le.s32.totalorder 1, %s28
      %p191 = scmp.lt.s32.totalorder %s28, 11
      %p192 = pnand %p190, %p191
      %p193 = pneg %p192
      // Predicated region
      $region9: #{tpu_custom_call.1} parent=5 // pred_check
        _
      $region10: #{tpu_custom_call.1} parent=5 // pred_check_branch
        %195 = sbr.rel (%p192) target = $region12
      $region11: #{tpu_custom_call.1} parent=5 // pred_region
        %s196 = ssub.s32 %s28, 1
      $region12: #{tpu_custom_call.1} parent=5 // pred_fallthru
        _
      %p197 = scmp.lt.s32.totalorder %s28, 10
      // Predicated region
      $region13: #{tpu_custom_call.1} parent=5 // pred_check
        %p198 = pneg %p197
      $region14: #{tpu_custom_call.1} parent=5 // pred_check_branch
        %200 = sbr.rel (%p198) target = $region16
      $region15: #{tpu_custom_call.1} parent=5 // pred_region
        // Predicated region
        $region17: #{tpu_custom_call.1} parent=15 // pred_check
          %p201 = pneg %p60
        $region18: #{tpu_custom_call.1} parent=15 // pred_check_branch
          %203 = sbr.rel (%p201) target = $region20
        $region19: #{tpu_custom_call.1} parent=15 // pred_region
          %s204 = sand.u32 %s50, 1
          %s205 = scalar_lea.sflag [#allocation5], %s204
          %s206 = sand.u32 %s50, 1
          %s207 = smul.addr %s206, 128
          %s208 = scalar_lea.vmem [#allocation4], %s207
          %s209 = smul.u32 16, %s35
          %211 = vsyncadd %s205, 0
          %s212 = smul.addr %s209, 2
          %s213 = smul.addr %s212, 4
          %s214 = scalar_lea.hbm %s1, %s213
          %s215 = sshll.u32 %s214, 4
          %s216 = int_to_ptr.hbm [resolvable:$true] %s215
          %s217 = sshll.u32 %s208, 4
          %s218 = int_to_ptr.vmem [resolvable:$true] %s217
          %223 = dma.hbm_to_vmem [thread:$0]  %s216, 2048, %s218, %s205, 128, 128, 8
        $region20: #{tpu_custom_call.1} parent=15 // pred_fallthru
          _
        // Predicated region
        $region21: #{tpu_custom_call.1} parent=15 // pred_check
          %p224 = pneg %p90
        $region22: #{tpu_custom_call.1} parent=15 // pred_check_branch
          %226 = sbr.rel (%p224) target = $region24
        $region23: #{tpu_custom_call.1} parent=15 // pred_region
          %s227 = sand.u32 %s80, 1
          %s228 = scalar_lea.sflag [#allocation8], %s227
          %s229 = sand.u32 %s80, 1
          %s230 = smul.addr %s229, 128
          %s231 = scalar_lea.vmem [#allocation7], %s230
          %s232 = sld [smem:[#allocation3 + %s35]]
          %234 = vsyncadd %s228, 0
          %s235 = smul.addr %s232, 64
          %s236 = sadd.s32 %s36, %s235
          %s237 = smul.addr %s236, 4
          %s238 = scalar_lea.hbm %s2, %s237
          %s239 = sshll.u32 %s238, 4
          %s240 = int_to_ptr.hbm [resolvable:$true] %s239
          %s241 = sshll.u32 %s231, 4
          %s242 = int_to_ptr.vmem [resolvable:$true] %s241
          %247 = dma.hbm_to_vmem [thread:$0]  %s240, 2048, %s242, %s228, 128, 64, 4
        $region24: #{tpu_custom_call.1} parent=15 // pred_fallthru
          _
        // Predicated region
        $region25: #{tpu_custom_call.1} parent=15 // pred_check
          %p248 = pneg %p118
        $region26: #{tpu_custom_call.1} parent=15 // pred_check_branch
          %250 = sbr.rel (%p248) target = $region28
        $region27: #{tpu_custom_call.1} parent=15 // pred_region
          %s251 = sld [smem:[#allocation3 + %s35]]
          %p252 = scmp.lt.s32.totalorder %s251, 3
          %s253 = scalar_select %p252, %s251, 3
          %s254 = smul.addr %s253, 32
          %s255 = smul.addr %s254, 4
          %s256 = scalar_lea.vmem %s3, %s255
          %s257 = sld [smem:[#allocation3 + %s35]]
        $region28: #{tpu_custom_call.1} parent=15 // pred_fallthru
          _
        // Predicated region
        $region29: #{tpu_custom_call.1} parent=15 // pred_check
          %p258 = pneg %p148
        $region30: #{tpu_custom_call.1} parent=15 // pred_check_branch
          %260 = sbr.rel (%p258) target = $region32
        $region31: #{tpu_custom_call.1} parent=15 // pred_region
          %s261 = sld [smem:[#allocation3 + %s35]]
          %p262 = scmp.lt.s32.totalorder %s261, 3
          %s263 = scalar_select %p262, %s261, 3
          %p264 = scmp.lt.s32.totalorder %s36, 1
          %s265 = scalar_select %p264, %s36, 1
          %s266 = smul.addr %s263, 2
          %s267 = sadd.s32 %s265, %s266
          %s268 = smul.addr %s267, 4
          %s269 = scalar_lea.vmem %s4, %s268
          %s270 = sld [smem:[#allocation3 + %s35]]
        $region32: #{tpu_custom_call.1} parent=15 // pred_fallthru
          _
      $region16: #{tpu_custom_call.1} parent=5 // pred_fallthru
        _
      %p271 = scmp.le.s32.totalorder 1, %s28
      %p272 = scmp.lt.s32.totalorder %s28, 11
      %p273 = pnand %p271, %p272
      %p274 = pneg %p273
      // Predicated region
      $region33: #{tpu_custom_call.1} parent=5 // pred_check
        _
      $region34: #{tpu_custom_call.1} parent=5 // pred_check_branch
        %276 = sbr.rel (%p273) target = $region36
      $region35: #{tpu_custom_call.1} parent=5 // pred_region
        %s277 = ssub.s32 %s28, 1
        %s278 = sand.u32 %s53, 1
        %s279 = scalar_lea.sflag [#allocation5], %s278
        %s280 = sand.u32 %s53, 1
        %s281 = smul.addr %s280, 128
        %s282 = scalar_lea.vmem [#allocation4], %s281
        // Predicated region
        $region37: #{tpu_custom_call.1} parent=35 // pred_check
          %p283 = pneg %p66
        $region38: #{tpu_custom_call.1} parent=35 // pred_check_branch
          %285 = sbr.rel (%p283) target = $region40
        $region39: #{tpu_custom_call.1} parent=35 // pred_region
          %287 = dma.done %s279, 2048
        $region40: #{tpu_custom_call.1} parent=35 // pred_fallthru
          _
        %s288 = sand.u32 %s83, 1
        %s289 = scalar_lea.sflag [#allocation8], %s288
        %s290 = sand.u32 %s83, 1
        %s291 = smul.addr %s290, 128
        %s292 = scalar_lea.vmem [#allocation7], %s291
        // Predicated region
        $region41: #{tpu_custom_call.1} parent=35 // pred_check
          %p293 = pneg %p96
        $region42: #{tpu_custom_call.1} parent=35 // pred_check_branch
          %295 = sbr.rel (%p293) target = $region44
        $region43: #{tpu_custom_call.1} parent=35 // pred_region
          %297 = dma.done %s289, 2048
        $region44: #{tpu_custom_call.1} parent=35 // pred_fallthru
          _
        %s298 = sand.u32 %s53, 1
        %s299 = scalar_lea.sflag [#allocation5], %s298
        %s300 = sand.u32 %s53, 1
        %s301 = smul.addr %s300, 128
        %s302 = scalar_lea.vmem [#allocation4], %s301
        %p303 = pneg %p66
        %p304 = pneg %p63
        %s305 = sand.u32 %s83, 1
        %s306 = scalar_lea.sflag [#allocation8], %s305
        %s307 = sand.u32 %s83, 1
        %s308 = smul.addr %s307, 128
        %s309 = scalar_lea.vmem [#allocation7], %s308
        %p310 = pneg %p96
        %p311 = pneg %p93
        %s312 = sld [smem:[#allocation3 + %s37]]
        %p313 = scmp.lt.s32.totalorder %s312, 3
        %s314 = scalar_select %p313, %s312, 3
        %s315 = smul.addr %s314, 32
        %s316 = smul.addr %s315, 4
        %s317 = scalar_lea.vmem %s3, %s316
        %p318 = pneg %p124
        %p319 = pneg %p121
        %s320 = sld [smem:[#allocation3 + %s37]]
        %p321 = scmp.lt.s32.totalorder %s320, 3
        %s322 = scalar_select %p321, %s320, 3
        %p323 = scmp.lt.s32.totalorder %s38, 1
        %s324 = scalar_select %p323, %s38, 1
        %s325 = smul.addr %s322, 2
        %s326 = sadd.s32 %s324, %s325
        %s327 = smul.addr %s326, 4
        %s328 = scalar_lea.vmem %s4, %s327
        %p329 = pneg %p154
        %p330 = pneg %p151
        %p331 = pneg %p182
        %p332 = pneg %p179
        %s333 = sand.u32 %s169, 1
        %s334 = scalar_lea.sflag [#allocation6], %s333
        %s335 = sand.u32 %s169, 1
        %s336 = smul.addr %s335, 128
        %s337 = scalar_lea.vmem [#allocation9], %s336
        %s338 = smul.u32 16, %s37
        %s339 = sld [smem:[#allocation3 + %s37]]
        %s340 = sld [smem:[#allocation3 + %s37]]
        %p341 = scmp.lt.s32.totalorder %s340, 3
        %s342 = scalar_select %p341, %s340, 3
        %s343 = smul.addr %s342, 32
        %s344 = smul.addr %s343, 4
        %s345 = scalar_lea.vmem %s3, %s344
        %s346 = sld [smem:[#allocation3 + %s37]]
        %s347 = sld [smem:[#allocation3 + %s37]]
        %p348 = scmp.lt.s32.totalorder %s347, 3
        %s349 = scalar_select %p348, %s347, 3
        %p350 = scmp.lt.s32.totalorder %s38, 1
        %s351 = scalar_select %p350, %s38, 1
        %s352 = smul.addr %s349, 2
        %s353 = sadd.s32 %s351, %s352
        %s354 = smul.addr %s353, 4
        %s355 = scalar_lea.vmem %s4, %s354
        %s356 = sld [smem:[#allocation3 + %s37]]
        %s357 = smul.u32 16, %s37
        %v359 = vld [vmem:[%s282] sm:$0xff]
        %v360 = vld [vmem:[%s282 + $0x8] sm:$0xff]
        %v361 = vld [vmem:[%s282 + $0x10] sm:$0xff]
        %v362 = vld [vmem:[%s282 + $0x18] sm:$0xff]
        %v363 = vld [vmem:[%s282 + $0x20] sm:$0xff]
        %v364 = vld [vmem:[%s282 + $0x28] sm:$0xff]
        %v365 = vld [vmem:[%s282 + $0x30] sm:$0xff]
        %v366 = vld [vmem:[%s282 + $0x38] sm:$0xff]
        %v367 = vld [vmem:[%s282 + $0x40] sm:$0xff]
        %v368 = vld [vmem:[%s282 + $0x48] sm:$0xff]
        %v369 = vld [vmem:[%s282 + $0x50] sm:$0xff]
        %v370 = vld [vmem:[%s282 + $0x58] sm:$0xff]
        %v371 = vld [vmem:[%s282 + $0x60] sm:$0xff]
        %v372 = vld [vmem:[%s282 + $0x68] sm:$0xff]
        %v373 = vld [vmem:[%s282 + $0x70] sm:$0xff]
        %v374 = vld [vmem:[%s282 + $0x78] sm:$0xff]
        %v375 = vld [vmem:[%s292] sm:$0xf]
        %v376 = vld [vmem:[%s292 + $0x4] sm:$0xf]
        %v377 = vld [vmem:[%s292 + $0x8] sm:$0xf]
        %v378 = vld [vmem:[%s292 + $0xc] sm:$0xf]
        %v379 = vld [vmem:[%s292 + $0x10] sm:$0xf]
        %v380 = vld [vmem:[%s292 + $0x14] sm:$0xf]
        %v381 = vld [vmem:[%s292 + $0x18] sm:$0xf]
        %v382 = vld [vmem:[%s292 + $0x1c] sm:$0xf]
        %v383 = vld [vmem:[%s292 + $0x20] sm:$0xf]
        %v384 = vld [vmem:[%s292 + $0x24] sm:$0xf]
        %v385 = vld [vmem:[%s292 + $0x28] sm:$0xf]
        %v386 = vld [vmem:[%s292 + $0x2c] sm:$0xf]
        %v387 = vld [vmem:[%s292 + $0x30] sm:$0xf]
        %v388 = vld [vmem:[%s292 + $0x34] sm:$0xf]
        %v389 = vld [vmem:[%s292 + $0x38] sm:$0xf]
        %v390 = vld [vmem:[%s292 + $0x3c] sm:$0xf]
        %v391 = vld [vmem:[%s292 + $0x40] sm:$0xf]
        %v392 = vld [vmem:[%s292 + $0x44] sm:$0xf]
        %v393 = vld [vmem:[%s292 + $0x48] sm:$0xf]
        %v394 = vld [vmem:[%s292 + $0x4c] sm:$0xf]
        %v395 = vld [vmem:[%s292 + $0x50] sm:$0xf]
        %v396 = vld [vmem:[%s292 + $0x54] sm:$0xf]
        %v397 = vld [vmem:[%s292 + $0x58] sm:$0xf]
        %v398 = vld [vmem:[%s292 + $0x5c] sm:$0xf]
        %v399 = vld [vmem:[%s292 + $0x60] sm:$0xf]
        %v400 = vld [vmem:[%s292 + $0x64] sm:$0xf]
        %v401 = vld [vmem:[%s292 + $0x68] sm:$0xf]
        %v402 = vld [vmem:[%s292 + $0x6c] sm:$0xf]
        %v403 = vld [vmem:[%s292 + $0x70] sm:$0xf]
        %v404 = vld [vmem:[%s292 + $0x74] sm:$0xf]
        %v405 = vld [vmem:[%s292 + $0x78] sm:$0xf]
        %v406 = vld [vmem:[%s292 + $0x7c] sm:$0xf]
        %v407 = vld [vmem:[%s345] sm:$0xf]
        %v408 = vld [vmem:[%s345 + $0x4] sm:$0xf]
        %v409 = vld [vmem:[%s345 + $0x8] sm:$0xf]
        %v410 = vld [vmem:[%s345 + $0xc] sm:$0xf]
        %v411 = vld [vmem:[%s345 + $0x10] sm:$0xf]
        %v412 = vld [vmem:[%s345 + $0x14] sm:$0xf]
        %v413 = vld [vmem:[%s345 + $0x18] sm:$0xf]
        %v414 = vld [vmem:[%s345 + $0x1c] sm:$0xf]
        %v415 = vld [vmem:[%s345 + $0x20] sm:$0xf]
        %v416 = vld [vmem:[%s345 + $0x24] sm:$0xf]
        %v417 = vld [vmem:[%s345 + $0x28] sm:$0xf]
        %v418 = vld [vmem:[%s345 + $0x2c] sm:$0xf]
        %v419 = vld [vmem:[%s345 + $0x30] sm:$0xf]
        %v420 = vld [vmem:[%s345 + $0x34] sm:$0xf]
        %v421 = vld [vmem:[%s345 + $0x38] sm:$0xf]
        %v422 = vld [vmem:[%s345 + $0x3c] sm:$0xf]
        %v423 = vld [vmem:[%s345 + $0x40] sm:$0xf]
        %v424 = vld [vmem:[%s345 + $0x44] sm:$0xf]
        %v425 = vld [vmem:[%s345 + $0x48] sm:$0xf]
        %v426 = vld [vmem:[%s345 + $0x4c] sm:$0xf]
        %v427 = vld [vmem:[%s345 + $0x50] sm:$0xf]
        %v428 = vld [vmem:[%s345 + $0x54] sm:$0xf]
        %v429 = vld [vmem:[%s345 + $0x58] sm:$0xf]
        %v430 = vld [vmem:[%s345 + $0x5c] sm:$0xf]
        %v431 = vld [vmem:[%s345 + $0x60] sm:$0xf]
        %v432 = vld [vmem:[%s345 + $0x64] sm:$0xf]
        %v433 = vld [vmem:[%s345 + $0x68] sm:$0xf]
        %v434 = vld [vmem:[%s345 + $0x6c] sm:$0xf]
        %v435 = vld [vmem:[%s345 + $0x70] sm:$0xf]
        %v436 = vld [vmem:[%s345 + $0x74] sm:$0xf]
        %v437 = vld [vmem:[%s345 + $0x78] sm:$0xf]
        %v438 = vld [vmem:[%s345 + $0x7c] sm:$0xf]
        %v455 = vunpack.c.l.b16 %v359
        %v456 = vunpack.c.h.b16 %v359
        %v457 = vunpack.c.l.b16 %v360
        %v458 = vunpack.c.h.b16 %v360
        %v459 = vunpack.c.l.b16 %v361
        %v460 = vunpack.c.h.b16 %v361
        %v461 = vunpack.c.l.b16 %v362
        %v462 = vunpack.c.h.b16 %v362
        %v463 = vunpack.c.l.b16 %v363
        %v464 = vunpack.c.h.b16 %v363
        %v465 = vunpack.c.l.b16 %v364
        %v466 = vunpack.c.h.b16 %v364
        %v467 = vunpack.c.l.b16 %v365
        %v468 = vunpack.c.h.b16 %v365
        %v469 = vunpack.c.l.b16 %v366
        %v470 = vunpack.c.h.b16 %v366
        %v471 = vunpack.c.l.b16 %v367
        %v472 = vunpack.c.h.b16 %v367
        %v473 = vunpack.c.l.b16 %v368
        %v474 = vunpack.c.h.b16 %v368
        %v475 = vunpack.c.l.b16 %v369
        %v476 = vunpack.c.h.b16 %v369
        %v477 = vunpack.c.l.b16 %v370
        %v478 = vunpack.c.h.b16 %v370
        %v479 = vunpack.c.l.b16 %v371
        %v480 = vunpack.c.h.b16 %v371
        %v481 = vunpack.c.l.b16 %v372
        %v482 = vunpack.c.h.b16 %v372
        %v483 = vunpack.c.l.b16 %v373
        %v484 = vunpack.c.h.b16 %v373
        %v485 = vunpack.c.l.b16 %v374
        %v486 = vunpack.c.h.b16 %v374
        %v487 = vpack.c.b16 %v457, %v455
        %v488 = vpack.c.b16 %v458, %v456
        %v489 = vpack.c.b16 %v461, %v459
        %v490 = vpack.c.b16 %v462, %v460
        %v491 = vpack.c.b16 %v465, %v463
        %v492 = vpack.c.b16 %v466, %v464
        %v493 = vpack.c.b16 %v469, %v467
        %v494 = vpack.c.b16 %v470, %v468
        %v495 = vpack.c.b16 %v473, %v471
        %v496 = vpack.c.b16 %v474, %v472
        %v497 = vpack.c.b16 %v477, %v475
        %v498 = vpack.c.b16 %v478, %v476
        %v499 = vpack.c.b16 %v481, %v479
        %v500 = vpack.c.b16 %v482, %v480
        %v501 = vpack.c.b16 %v485, %v483
        %v502 = vpack.c.b16 %v486, %v484
        %v551 = vunpack.c.l.b16 %v407
        %v552 = vunpack.c.l.b16 %v408
        %v553 = vunpack.c.l.b16 %v409
        %v554 = vunpack.c.l.b16 %v410
        %v555 = vunpack.c.l.b16 %v411
        %v556 = vunpack.c.l.b16 %v412
        %v557 = vunpack.c.l.b16 %v413
        %v558 = vunpack.c.l.b16 %v414
        %v559 = vunpack.c.l.b16 %v415
        %v560 = vunpack.c.l.b16 %v416
        %v561 = vunpack.c.l.b16 %v417
        %v562 = vunpack.c.l.b16 %v418
        %v563 = vunpack.c.l.b16 %v419
        %v564 = vunpack.c.l.b16 %v420
        %v565 = vunpack.c.l.b16 %v421
        %v566 = vunpack.c.l.b16 %v422
        %v567 = vunpack.c.l.b16 %v423
        %v568 = vunpack.c.l.b16 %v424
        %v569 = vunpack.c.l.b16 %v425
        %v570 = vunpack.c.l.b16 %v426
        %v571 = vunpack.c.l.b16 %v427
        %v572 = vunpack.c.l.b16 %v428
        %v573 = vunpack.c.l.b16 %v429
        %v574 = vunpack.c.l.b16 %v430
        %v575 = vunpack.c.l.b16 %v431
        %v576 = vunpack.c.l.b16 %v432
        %v577 = vunpack.c.l.b16 %v433
        %v578 = vunpack.c.l.b16 %v434
        %v579 = vunpack.c.l.b16 %v435
        %v580 = vunpack.c.l.b16 %v436
        %v581 = vunpack.c.l.b16 %v437
        %v582 = vunpack.c.l.b16 %v438
        %v583 = vpack.c.b16 %v552, %v551
        %v584 = vpack.c.b16 %v554, %v553
        %v585 = vpack.c.b16 %v556, %v555
        %v586 = vpack.c.b16 %v558, %v557
        %v587 = vpack.c.b16 %v560, %v559
        %v588 = vpack.c.b16 %v562, %v561
        %v589 = vpack.c.b16 %v564, %v563
        %v590 = vpack.c.b16 %v566, %v565
        %v591 = vpack.c.b16 %v568, %v567
        %v592 = vpack.c.b16 %v570, %v569
        %v593 = vpack.c.b16 %v572, %v571
        %v594 = vpack.c.b16 %v574, %v573
        %v595 = vpack.c.b16 %v576, %v575
        %v596 = vpack.c.b16 %v578, %v577
        %v597 = vpack.c.b16 %v580, %v579
        %v598 = vpack.c.b16 %v582, %v581
        %615 = vmatpush.bf16.msra.mxu0 %v590
        %616 = vmatpush.bf16.msra.mxu0 %v589
        %617 = vmatpush.bf16.msra.mxu0 %v588
        %618 = vmatpush.bf16.msra.mxu0 %v587
        %619 = vmatpush.bf16.msra.mxu0 %v586
        %620 = vmatpush.bf16.msra.mxu0 %v585
        %621 = vmatpush.bf16.msra.mxu0 %v584
        %622 = vmatpush.bf16.msra.mxu0 %v583
        %623 = vmatmul.bf16.gmra.mxu0 %v487
        %v624 = vpop.f32.mrf.mxu0
        %v625 = vadd.f32 0.0, %v624
        %v626 = vpop.f32.mrf.mxu0
        %v627 = vadd.f32 0.0, %v626
        %628 = vmatmul.bf16.gmra.mxu0 %v489
        %v629 = vpop.f32.mrf.mxu0
        %v630 = vadd.f32 0.0, %v629
        %v631 = vpop.f32.mrf.mxu0
        %v632 = vadd.f32 0.0, %v631
        %633 = vmatmul.bf16.gmra.mxu0 %v491
        %v634 = vpop.f32.mrf.mxu0
        %v635 = vadd.f32 0.0, %v634
        %v636 = vpop.f32.mrf.mxu0
        %v637 = vadd.f32 0.0, %v636
        %638 = vmatmul.bf16.gmra.mxu0 %v493
        %v639 = vpop.f32.mrf.mxu0
        %v640 = vadd.f32 0.0, %v639
        %v641 = vpop.f32.mrf.mxu0
        %v642 = vadd.f32 0.0, %v641
        %643 = vmatmul.bf16.gmra.mxu0 %v495
        %v644 = vpop.f32.mrf.mxu0
        %v645 = vadd.f32 0.0, %v644
        %v646 = vpop.f32.mrf.mxu0
        %v647 = vadd.f32 0.0, %v646
        %648 = vmatmul.bf16.gmra.mxu0 %v497
        %v649 = vpop.f32.mrf.mxu0
        %v650 = vadd.f32 0.0, %v649
        %v651 = vpop.f32.mrf.mxu0
        %v652 = vadd.f32 0.0, %v651
        %653 = vmatmul.bf16.gmra.mxu0 %v499
        %v654 = vpop.f32.mrf.mxu0
        %v655 = vadd.f32 0.0, %v654
        %v656 = vpop.f32.mrf.mxu0
        %v657 = vadd.f32 0.0, %v656
        %658 = vmatmul.bf16.gmra.mxu0 %v501
        %v659 = vpop.f32.mrf.mxu0
        %v660 = vadd.f32 0.0, %v659
        %v661 = vpop.f32.mrf.mxu0
        %v662 = vadd.f32 0.0, %v661
        %663 = vdwg.mxu0
        %664 = vmatpush.bf16.msra.mxu0 %v598
        %665 = vmatpush.bf16.msra.mxu0 %v597
        %666 = vmatpush.bf16.msra.mxu0 %v596
        %667 = vmatpush.bf16.msra.mxu0 %v595
        %668 = vmatpush.bf16.msra.mxu0 %v594
        %669 = vmatpush.bf16.msra.mxu0 %v593
        %670 = vmatpush.bf16.msra.mxu0 %v592
        %671 = vmatpush.bf16.msra.mxu0 %v591
        %672 = vmatmul.bf16.gmra.mxu0 %v488
        %v673 = vpop.f32.mrf.mxu0
        %v674 = vadd.f32 %v625, %v673
        %v675 = vpop.f32.mrf.mxu0
        %v676 = vadd.f32 %v627, %v675
        %677 = vmatmul.bf16.gmra.mxu0 %v490
        %v678 = vpop.f32.mrf.mxu0
        %v679 = vadd.f32 %v630, %v678
        %v680 = vpop.f32.mrf.mxu0
        %v681 = vadd.f32 %v632, %v680
        %682 = vmatmul.bf16.gmra.mxu0 %v492
        %v683 = vpop.f32.mrf.mxu0
        %v684 = vadd.f32 %v635, %v683
        %v685 = vpop.f32.mrf.mxu0
        %v686 = vadd.f32 %v637, %v685
        %687 = vmatmul.bf16.gmra.mxu0 %v494
        %v688 = vpop.f32.mrf.mxu0
        %v689 = vadd.f32 %v640, %v688
        %v690 = vpop.f32.mrf.mxu0
        %v691 = vadd.f32 %v642, %v690
        %692 = vmatmul.bf16.gmra.mxu0 %v496
        %v693 = vpop.f32.mrf.mxu0
        %v694 = vadd.f32 %v645, %v693
        %v695 = vpop.f32.mrf.mxu0
        %v696 = vadd.f32 %v647, %v695
        %697 = vmatmul.bf16.gmra.mxu0 %v498
        %v698 = vpop.f32.mrf.mxu0
        %v699 = vadd.f32 %v650, %v698
        %v700 = vpop.f32.mrf.mxu0
        %v701 = vadd.f32 %v652, %v700
        %702 = vmatmul.bf16.gmra.mxu0 %v500
        %v703 = vpop.f32.mrf.mxu0
        %v704 = vadd.f32 %v655, %v703
        %v705 = vpop.f32.mrf.mxu0
        %v706 = vadd.f32 %v657, %v705
        %707 = vmatmul.bf16.gmra.mxu0 %v502
        %v708 = vpop.f32.mrf.mxu0
        %v709 = vadd.f32 %v660, %v708
        %v710 = vpop.f32.mrf.mxu0
        %v711 = vadd.f32 %v662, %v710
        %712 = vdwg.mxu0
        %v713 = vpack.c.bf16 %v676, %v674
        %v714 = vpack.c.bf16 %v681, %v679
        %v715 = vpack.c.bf16 %v686, %v684
        %v716 = vpack.c.bf16 %v691, %v689
        %v717 = vpack.c.bf16 %v696, %v694
        %v718 = vpack.c.bf16 %v701, %v699
        %v719 = vpack.c.bf16 %v706, %v704
        %v720 = vpack.c.bf16 %v711, %v709
        %v721 = vld [vmem:[%s355] sm:$0xf]
        %vm722 = vcmask 64512
        %v724 = vsel %vm722, %v713, 0
        %v727 = vsel %vm722, %v714, 0
        %v730 = vsel %vm722, %v715, 0
        %v733 = vsel %vm722, %v716, 0
        %v736 = vsel %vm722, %v717, 0
        %v739 = vsel %vm722, %v718, 0
        %v742 = vsel %vm722, %v719, 0
        %v745 = vsel %vm722, %v720, 0
        %vm747 = vcmask 1043456
        %v749 = vsel %vm747, %v721, 0
        %751 = vmatpush.bf16.msra.mxu0 0
        %752 = vmatpush.bf16.msra.mxu0 0
        %753 = vmatpush.bf16.msra.mxu0 0
        %754 = vmatpush.bf16.msra.mxu0 0
        %755 = vmatpush.bf16.msra.mxu0 0
        %756 = vmatpush.bf16.msra.mxu0 0
        %757 = vmatpush.bf16.msra.mxu0 0
        %758 = vmatpush.bf16.msra.mxu0 %v749
        %759 = vmatmul.bf16.gmra.mxu0 %v724
        %v760 = vpop.f32.mrf.mxu0
        %v761 = vadd.f32 0.0, %v760
        %v762 = vpop.f32.mrf.mxu0
        %v763 = vadd.f32 0.0, %v762
        %764 = vmatmul.bf16.gmra.mxu0 %v727
        %v765 = vpop.f32.mrf.mxu0
        %v766 = vadd.f32 0.0, %v765
        %v767 = vpop.f32.mrf.mxu0
        %v768 = vadd.f32 0.0, %v767
        %769 = vmatmul.bf16.gmra.mxu0 %v730
        %v770 = vpop.f32.mrf.mxu0
        %v771 = vadd.f32 0.0, %v770
        %v772 = vpop.f32.mrf.mxu0
        %v773 = vadd.f32 0.0, %v772
        %774 = vmatmul.bf16.gmra.mxu0 %v733
        %v775 = vpop.f32.mrf.mxu0
        %v776 = vadd.f32 0.0, %v775
        %v777 = vpop.f32.mrf.mxu0
        %v778 = vadd.f32 0.0, %v777
        %779 = vmatmul.bf16.gmra.mxu0 %v736
        %v780 = vpop.f32.mrf.mxu0
        %v781 = vadd.f32 0.0, %v780
        %v782 = vpop.f32.mrf.mxu0
        %v783 = vadd.f32 0.0, %v782
        %784 = vmatmul.bf16.gmra.mxu0 %v739
        %v785 = vpop.f32.mrf.mxu0
        %v786 = vadd.f32 0.0, %v785
        %v787 = vpop.f32.mrf.mxu0
        %v788 = vadd.f32 0.0, %v787
        %789 = vmatmul.bf16.gmra.mxu0 %v742
        %v790 = vpop.f32.mrf.mxu0
        %v791 = vadd.f32 0.0, %v790
        %v792 = vpop.f32.mrf.mxu0
        %v793 = vadd.f32 0.0, %v792
        %794 = vmatmul.bf16.gmra.mxu0 %v745
        %v795 = vpop.f32.mrf.mxu0
        %v796 = vadd.f32 0.0, %v795
        %v797 = vpop.f32.mrf.mxu0
        %v798 = vadd.f32 0.0, %v797
        %799 = vdwg.mxu0
        %v832 = vunpack.c.l.b16 %v375
        %v833 = vunpack.c.l.b16 %v376
        %v834 = vunpack.c.l.b16 %v377
        %v835 = vunpack.c.l.b16 %v378
        %v836 = vunpack.c.l.b16 %v379
        %v837 = vunpack.c.l.b16 %v380
        %v838 = vunpack.c.l.b16 %v381
        %v839 = vunpack.c.l.b16 %v382
        %v840 = vunpack.c.l.b16 %v383
        %v841 = vunpack.c.l.b16 %v384
        %v842 = vunpack.c.l.b16 %v385
        %v843 = vunpack.c.l.b16 %v386
        %v844 = vunpack.c.l.b16 %v387
        %v845 = vunpack.c.l.b16 %v388
        %v846 = vunpack.c.l.b16 %v389
        %v847 = vunpack.c.l.b16 %v390
        %v848 = vunpack.c.l.b16 %v391
        %v849 = vunpack.c.l.b16 %v392
        %v850 = vunpack.c.l.b16 %v393
        %v851 = vunpack.c.l.b16 %v394
        %v852 = vunpack.c.l.b16 %v395
        %v853 = vunpack.c.l.b16 %v396
        %v854 = vunpack.c.l.b16 %v397
        %v855 = vunpack.c.l.b16 %v398
        %v856 = vunpack.c.l.b16 %v399
        %v857 = vunpack.c.l.b16 %v400
        %v858 = vunpack.c.l.b16 %v401
        %v859 = vunpack.c.l.b16 %v402
        %v860 = vunpack.c.l.b16 %v403
        %v861 = vunpack.c.l.b16 %v404
        %v862 = vunpack.c.l.b16 %v405
        %v863 = vunpack.c.l.b16 %v406
        %v864 = vpack.c.b16 %v833, %v832
        %v865 = vpack.c.b16 %v835, %v834
        %v866 = vpack.c.b16 %v837, %v836
        %v867 = vpack.c.b16 %v839, %v838
        %v868 = vpack.c.b16 %v841, %v840
        %v869 = vpack.c.b16 %v843, %v842
        %v870 = vpack.c.b16 %v845, %v844
        %v871 = vpack.c.b16 %v847, %v846
        %v872 = vpack.c.b16 %v849, %v848
        %v873 = vpack.c.b16 %v851, %v850
        %v874 = vpack.c.b16 %v853, %v852
        %v875 = vpack.c.b16 %v855, %v854
        %v876 = vpack.c.b16 %v857, %v856
        %v877 = vpack.c.b16 %v859, %v858
        %v878 = vpack.c.b16 %v861, %v860
        %v879 = vpack.c.b16 %v863, %v862
        %896 = vmatpush.bf16.msra.mxu0 %v871
        %897 = vmatpush.bf16.msra.mxu0 %v870
        %898 = vmatpush.bf16.msra.mxu0 %v869
        %899 = vmatpush.bf16.msra.mxu0 %v868
        %900 = vmatpush.bf16.msra.mxu0 %v867
        %901 = vmatpush.bf16.msra.mxu0 %v866
        %902 = vmatpush.bf16.msra.mxu0 %v865
        %903 = vmatpush.bf16.msra.mxu0 %v864
        %904 = vmatmul.bf16.gmra.mxu0 %v487
        %v905 = vpop.f32.mrf.mxu0
        %v906 = vadd.f32 %v761, %v905
        %v907 = vpop.f32.mrf.mxu0
        %v908 = vadd.f32 %v763, %v907
        %909 = vmatmul.bf16.gmra.mxu0 %v489
        %v910 = vpop.f32.mrf.mxu0
        %v911 = vadd.f32 %v766, %v910
        %v912 = vpop.f32.mrf.mxu0
        %v913 = vadd.f32 %v768, %v912
        %914 = vmatmul.bf16.gmra.mxu0 %v491
        %v915 = vpop.f32.mrf.mxu0
        %v916 = vadd.f32 %v771, %v915
        %v917 = vpop.f32.mrf.mxu0
        %v918 = vadd.f32 %v773, %v917
        %919 = vmatmul.bf16.gmra.mxu0 %v493
        %v920 = vpop.f32.mrf.mxu0
        %v921 = vadd.f32 %v776, %v920
        %v922 = vpop.f32.mrf.mxu0
        %v923 = vadd.f32 %v778, %v922
        %924 = vmatmul.bf16.gmra.mxu0 %v495
        %v925 = vpop.f32.mrf.mxu0
        %v926 = vadd.f32 %v781, %v925
        %v927 = vpop.f32.mrf.mxu0
        %v928 = vadd.f32 %v783, %v927
        %929 = vmatmul.bf16.gmra.mxu0 %v497
        %v930 = vpop.f32.mrf.mxu0
        %v931 = vadd.f32 %v786, %v930
        %v932 = vpop.f32.mrf.mxu0
        %v933 = vadd.f32 %v788, %v932
        %934 = vmatmul.bf16.gmra.mxu0 %v499
        %v935 = vpop.f32.mrf.mxu0
        %v936 = vadd.f32 %v791, %v935
        %v937 = vpop.f32.mrf.mxu0
        %v938 = vadd.f32 %v793, %v937
        %939 = vmatmul.bf16.gmra.mxu0 %v501
        %v940 = vpop.f32.mrf.mxu0
        %v941 = vadd.f32 %v796, %v940
        %v942 = vpop.f32.mrf.mxu0
        %v943 = vadd.f32 %v798, %v942
        %944 = vdwg.mxu0
        %945 = vmatpush.bf16.msra.mxu0 %v879
        %946 = vmatpush.bf16.msra.mxu0 %v878
        %947 = vmatpush.bf16.msra.mxu0 %v877
        %948 = vmatpush.bf16.msra.mxu0 %v876
        %949 = vmatpush.bf16.msra.mxu0 %v875
        %950 = vmatpush.bf16.msra.mxu0 %v874
        %951 = vmatpush.bf16.msra.mxu0 %v873
        %952 = vmatpush.bf16.msra.mxu0 %v872
        %953 = vmatmul.bf16.gmra.mxu0 %v488
        %v954 = vpop.f32.mrf.mxu0
        %v955 = vadd.f32 %v906, %v954
        %v956 = vpop.f32.mrf.mxu0
        %v957 = vadd.f32 %v908, %v956
        %958 = vmatmul.bf16.gmra.mxu0 %v490
        %v959 = vpop.f32.mrf.mxu0
        %v960 = vadd.f32 %v911, %v959
        %v961 = vpop.f32.mrf.mxu0
        %v962 = vadd.f32 %v913, %v961
        %963 = vmatmul.bf16.gmra.mxu0 %v492
        %v964 = vpop.f32.mrf.mxu0
        %v965 = vadd.f32 %v916, %v964
        %v966 = vpop.f32.mrf.mxu0
        %v967 = vadd.f32 %v918, %v966
        %968 = vmatmul.bf16.gmra.mxu0 %v494
        %v969 = vpop.f32.mrf.mxu0
        %v970 = vadd.f32 %v921, %v969
        %v971 = vpop.f32.mrf.mxu0
        %v972 = vadd.f32 %v923, %v971
        %973 = vmatmul.bf16.gmra.mxu0 %v496
        %v974 = vpop.f32.mrf.mxu0
        %v975 = vadd.f32 %v926, %v974
        %v976 = vpop.f32.mrf.mxu0
        %v977 = vadd.f32 %v928, %v976
        %978 = vmatmul.bf16.gmra.mxu0 %v498
        %v979 = vpop.f32.mrf.mxu0
        %v980 = vadd.f32 %v931, %v979
        %v981 = vpop.f32.mrf.mxu0
        %v982 = vadd.f32 %v933, %v981
        %983 = vmatmul.bf16.gmra.mxu0 %v500
        %v984 = vpop.f32.mrf.mxu0
        %v985 = vadd.f32 %v936, %v984
        %v986 = vpop.f32.mrf.mxu0
        %v987 = vadd.f32 %v938, %v986
        %988 = vmatmul.bf16.gmra.mxu0 %v502
        %v989 = vpop.f32.mrf.mxu0
        %v990 = vadd.f32 %v941, %v989
        %v991 = vpop.f32.mrf.mxu0
        %v992 = vadd.f32 %v943, %v991
        %993 = vdwg.mxu0
        %994 = vst [vmem:[%s337] sm:$0xff] %v955
        %995 = vst [vmem:[%s337 + $0x8] sm:$0xff] %v957
        %996 = vst [vmem:[%s337 + $0x10] sm:$0xff] %v960
        %997 = vst [vmem:[%s337 + $0x18] sm:$0xff] %v962
        %998 = vst [vmem:[%s337 + $0x20] sm:$0xff] %v965
        %999 = vst [vmem:[%s337 + $0x28] sm:$0xff] %v967
        %1000 = vst [vmem:[%s337 + $0x30] sm:$0xff] %v970
        %1001 = vst [vmem:[%s337 + $0x38] sm:$0xff] %v972
        %1002 = vst [vmem:[%s337 + $0x40] sm:$0xff] %v975
        %1003 = vst [vmem:[%s337 + $0x48] sm:$0xff] %v977
        %1004 = vst [vmem:[%s337 + $0x50] sm:$0xff] %v980
        %1005 = vst [vmem:[%s337 + $0x58] sm:$0xff] %v982
        %1006 = vst [vmem:[%s337 + $0x60] sm:$0xff] %v985
        %1007 = vst [vmem:[%s337 + $0x68] sm:$0xff] %v987
        %1008 = vst [vmem:[%s337 + $0x70] sm:$0xff] %v990
        %1009 = vst [vmem:[%s337 + $0x78] sm:$0xff] %v992
        %s1010 = sand.u32 %s169, 1
        %s1011 = scalar_lea.sflag [#allocation6], %s1010
        %s1012 = sand.u32 %s169, 1
        %s1013 = smul.addr %s1012, 128
        %s1014 = scalar_lea.vmem [#allocation9], %s1013
        // Predicated region
        $region45: #{tpu_custom_call.1} parent=35 // pred_check
          %p1015 = pneg %p179
        $region46: #{tpu_custom_call.1} parent=35 // pred_check_branch
          %1017 = sbr.rel (%p1015) target = $region48
        $region47: #{tpu_custom_call.1} parent=35 // pred_region
          %s1018 = smul.u32 16, %s37
          %1020 = vsyncadd %s1011, 0
          %s1021 = smul.addr %s1018, 2
          %s1022 = sadd.s32 %s38, %s1021
          %s1023 = smul.addr %s1022, 8
          %s1024 = scalar_lea.hbm %s5, %s1023
          %s1025 = sshll.u32 %s1014, 4
          %s1026 = int_to_ptr.vmem [resolvable:$true] %s1025
          %s1027 = sshll.u32 %s1024, 4
          %s1028 = int_to_ptr.hbm [resolvable:$true] %s1027
          %1033 = dma.vmem_to_hbm [thread:$0]  %s1026, 2048, %s1028, %s1011, 128, 256, 8
        $region48: #{tpu_custom_call.1} parent=35 // pred_fallthru
          _
      $region36: #{tpu_custom_call.1} parent=5 // pred_fallthru
        _
      %p1034 = scmp.le.s32.totalorder 2, %s28
      // Predicated region
      $region49: #{tpu_custom_call.1} parent=5 // pred_check
        %p1035 = pneg %p1034
      $region50: #{tpu_custom_call.1} parent=5 // pred_check_branch
        %1037 = sbr.rel (%p1035) target = $region52
      $region51: #{tpu_custom_call.1} parent=5 // pred_region
        %s1038 = ssub.s32 %s28, 2
        // Predicated region
        $region53: #{tpu_custom_call.1} parent=51 // pred_check
          %p1039 = pneg %p185
        $region54: #{tpu_custom_call.1} parent=51 // pred_check_branch
          %1041 = sbr.rel (%p1039) target = $region56
        $region55: #{tpu_custom_call.1} parent=51 // pred_region
          %s1042 = sand.u32 %s170, 1
          %s1043 = scalar_lea.sflag [#allocation6], %s1042
          %s1044 = sand.u32 %s170, 1
          %s1045 = smul.addr %s1044, 128
          %s1046 = scalar_lea.vmem [#allocation9], %s1045
          %1048 = dma.done %s1043, 2048
        $region56: #{tpu_custom_call.1} parent=51 // pred_fallthru
          _
      $region52: #{tpu_custom_call.1} parent=5 // pred_fallthru
        _
    $region6: #{tpu_custom_call.1} parent=1 // loop_footer
      %s32 = sadd.s32 1, %s28
    $region7: #{tpu_custom_call.1} parent=1 // loop_footer_branch
      %27 = sbr.rel target = $region3
    $region8: #{tpu_custom_call.1} parent=1 // loop_exit
      _
    %1049 = vsyncpa [#allocation5], 1
    %s1050 = scalar_lea.sflag [#allocation5], 1
    %1051 = vsyncpa %s1050, 1
    %1052 = vsyncpa [#allocation8], 1
    %s1053 = scalar_lea.sflag [#allocation8], 1
    %1054 = vsyncpa %s1053, 1
    %1055 = vsyncpa [#allocation6], 1
    %s1056 = scalar_lea.sflag [#allocation6], 1
    %1057 = vsyncpa %s1056, 1

</llo_original>
